<compile_context>
chip_gen: v7x
topology: tpu7x:2x2x1
jax: 0.10.0
libtpu: 0.0.40
codegen_flags: <defaults>
</compile_context>

<pallas_src>
import functools

import jax
import jax.numpy as jnp
from jax.experimental import pallas as pl
from jax.experimental.pallas import tpu as pltpu


def _convnn_fused_kernel(xp_ref, *rest, K, pad_l, n_layers, seq_len, mxu_dtype):
    """Fused Conv1d(padding='same') + ReLU stack for a block of batch samples.

    refs = (xp_ref, w1, b1, w2, b2, ..., o_ref)
      xp_ref : (B_blk, C_in, L + n_layers*(K-1))  input padded once, L on lanes
      w_i    : (C_i, K*C_{i-1})                    im2row-reshaped conv weights
      b_i    : (C_i, 1)                            bias (broadcast over lanes)
      o_ref  : (B_blk, C_n, L)                     output

    "Halo compute": each layer is a VALID conv over a frame that still carries
    the remaining halo; lanes outside the real [band, band+L) window are zeroed
    so the next layer sees exactly the zeros padding='same' would insert.
    """
    o_ref = rest[-1]
    wb_refs = rest[:-1]
    B_blk = xp_ref.shape[0]
    Lp = xp_ref.shape[2]
    L = seq_len

    # ---- hoisted lane-position iota and per-layer halo masks (shared by all
    #      batch samples; built once, reused) --------------------------------
    m1 = Lp - (K - 1)                                   # layer-1 output width
    lane_pos = jax.lax.broadcasted_iota(jnp.int32, (1, m1), 1)
    masks = []
    for i in range(n_layers - 1):
        if K > 1:
            band = (n_layers - 1 - i) * pad_l
            m_i = Lp - (i + 1) * (K - 1)
            pos = lane_pos[:, :m_i]
            masks.append((pos >= band) & (pos < band + L))
        else:
            masks.append(None)                          # K==1: no halo at all

    # ---- fused 3-layer chain, B_blk samples per grid step ------------------
    for b in range(B_blk):
        frame = xp_ref[b]                               # (C_cur, M_cur), f32
        for i in range(n_layers):
            w_ref, b_ref = wb_refs[2 * i], wb_refs[2 * i + 1]
            c_out, kcin = w_ref.shape
            c_in = kcin // K
            m_out = frame.shape[1] - (K - 1)
            w2 = w_ref[...]                             # (C_out, K*C_in)

            if kcin <= 128:
                # Small contraction: im2row -> ONE MXU matmul (K taps
                # concatenated along sublanes).
                taps = [frame[:, k:k + m_out] for k in range(K)]
                patches = jnp.concatenate(taps, axis=0) if K > 1 else taps[0]
                y = jnp.dot(w2, patches.astype(mxu_dtype),
                            preferred_element_type=jnp.float32)
            else:
                # Large contraction: K accumulated matmuls; never materialize
                # the K-wide patch buffer (saves vreg/VMEM at scale).
                y = jnp.dot(w2[:, :c_in],
                            frame[:, 0:m_out].astype(mxu_dtype),
                            preferred_element_type=jnp.float32)
                for k in range(1, K):
                    y += jnp.dot(w2[:, k * c_in:(k + 1) * c_in],
                                 frame[:, k:k + m_out].astype(mxu_dtype),
                                 preferred_element_type=jnp.float32)

            y = jnp.maximum(y + b_ref[...], 0.0)        # bias + ReLU in f32
            if i < n_layers - 1 and K > 1:
                # Zero halo lanes (left AND right) so the next layer sees the
                # zeros that padding='same' would have inserted.
                y = jnp.where(masks[i], y, 0.0)
            frame = y

        o_ref[b] = frame.astype(o_ref.dtype)            # (C_out, L)


def init_conv_params(key, in_ch, out_ch, kernel_size):
    """Deterministic Conv1d params (PyTorch-style uniform fan-in scaling)."""
    k_w, k_b = jax.random.split(key)
    bound = 1.0 / jnp.sqrt(in_ch * kernel_size)
    w_oik = jax.random.uniform(k_w, (out_ch, in_ch, kernel_size),
                               jnp.float32, -bound, bound)   # (Cout, Cin, K)
    b = jax.random.uniform(k_b, (out_ch,), jnp.float32, -bound, bound)
    return w_oik, b


def convnn_forward(x_ncl, params, kernel_size, *, batch_block=None,
                   mxu_dtype=None):
    """Fused ConvNN forward.  x_ncl: (N, C_in, L) -> (N, 3*c_dim, L).  No
    layout transposes: L stays on the lane axis the whole way."""
    K = kernel_size
    n_layers = len(params)
    pad_l = (K - 1) // 2                  # torch 'same' split (odd & even K)
    pad_r = K - 1 - pad_l

    N, C_in, L = x_ncl.shape
    B_blk = min(N, 8) if batch_block is None else max(1, min(batch_block, N))
    n_blocks = pl.cdiv(N, B_blk)
    N_pad = n_blocks * B_blk

    # bf16 MXU operands only pay off at scaled-up shapes (v6e/v7x); keep exact
    # f32 at toy sizes.  Elementwise work is always f32.
    if mxu_dtype is None:
        mxu_dtype = (jnp.bfloat16
                     if (K * max(C_in, params[-1][0].shape[1]) >= 256
                         and L >= 256)
                     else jnp.float32)

    # Pad ONCE with the full n-layer halo (and batch-pad to a B_blk multiple);
    # intermediates never round-trip HBM.
    xp = jnp.pad(x_ncl, ((0, N_pad - N), (0, 0),
                         (n_layers * pad_l, n_layers * pad_r)))
    Lp = L + n_layers * (K - 1)

    # Weight layout: torch (Cout, Cin, K) -> (Cout, K, Cin) -> (Cout, K*Cin),
    # so lane index k*Cin + ci matches the im2row/accumulated-tap ordering.
    w2ds, biases, c_dims = [], [], [C_in]
    for (w_oik, bias) in params:
        c_out, c_in, _ = w_oik.shape
        w2ds.append(jnp.transpose(w_oik, (0, 2, 1))
                    .reshape(c_out, K * c_in).astype(mxu_dtype))
        biases.append(bias.reshape(c_out, 1).astype(jnp.float32))
        c_dims.append(c_out)
    C_out = c_dims[-1]

    in_specs = [pl.BlockSpec((B_blk, C_in, Lp), lambda g: (g, 0, 0))]
    operands = [xp]
    for w2, b2 in zip(w2ds, biases):
        in_specs.append(pl.BlockSpec(w2.shape, lambda g: (0, 0)))
        in_specs.append(pl.BlockSpec(b2.shape, lambda g: (0, 0)))
        operands.extend([w2, b2])

    # Advisory cost model so XLA schedules the pad/slice around the call.
    flops, m = 0, Lp
    for i in range(n_layers):
        m -= (K - 1)
        flops += 2 * N_pad * m * (K * c_dims[i]) * c_dims[i + 1]
    bytes_accessed = int(4 * xp.size
                         + sum(w.dtype.itemsize * w.size for w in w2ds)
                         + sum(4 * b.size for b in biases)
                         + 4 * N_pad * C_out * L)

    kernel = functools.partial(_convnn_fused_kernel, K=K, pad_l=pad_l,
                               n_layers=n_layers, seq_len=L,
                               mxu_dtype=mxu_dtype)

    out = pl.pallas_call(
        kernel,
        out_shape=jax.ShapeDtypeStruct((N_pad, C_out, L), jnp.float32),
        grid=(n_blocks,),                       # B_blk samples per grid step
        in_specs=in_specs,
        out_specs=pl.BlockSpec((B_blk, C_out, L), lambda g: (g, 0, 0)),
        compiler_params=pltpu.CompilerParams(
            dimension_semantics=("parallel",)),  # megacore-splittable
        cost_estimate=pl.CostEstimate(
            flops=flops, transcendentals=0, bytes_accessed=bytes_accessed),
    )(*operands)

    return out[:N]                               # drop batch padding, NCL out


def reference_forward(x_ncl, params, kernel_size):
    """Pure-JAX reference (lax conv = cross-correlation, same as torch)."""
    h = x_ncl
    for (w_oik, b) in params:
        h = jax.lax.conv_general_dilated(
            h, w_oik, window_strides=(1,), padding="SAME",
            dimension_numbers=("NCH", "OIH", "NCH"))
        h = jnp.maximum(h + b[None, :, None], 0.0)
    return h


if __name__ == "__main__":
    # Small shapes consistent with the module's forward.
    batch, in_dim, seq = 2, 4, 16
    c_dim, kernel_size = 8, 3

    key = jax.random.PRNGKey(0)
    k_x, k1, k2, k3 = jax.random.split(key, 4)

    x = jax.random.normal(k_x, (batch, in_dim, seq), jnp.float32)  # NCL

    params = [
        init_conv_params(k1, in_dim, c_dim, kernel_size),
        init_conv_params(k2, c_dim, 2 * c_dim, kernel_size),
        init_conv_params(k3, 2 * c_dim, 3 * c_dim, kernel_size),
    ]

    out = jax.block_until_ready(convnn_forward(x, params, kernel_size))
    ref = reference_forward(x, params, kernel_size)

    assert out.shape == (batch, 3 * c_dim, seq), out.shape
    assert jnp.allclose(out, ref, atol=1e-5, rtol=1e-5), "mismatch vs reference"

    print("KERNEL_OK")
</pallas_src>

<mosaic_0001>
module attributes {stable_mosaic.version = 11 : i64} {
  func.func @_convnn_fused_kernel(%arg0: i32, %arg1: memref<2x4x22xf32, #tpu.memory_space<vmem>>, %arg2: memref<8x12xf32, #tpu.memory_space<vmem>>, %arg3: memref<8x1xf32, #tpu.memory_space<vmem>>, %arg4: memref<16x24xf32, #tpu.memory_space<vmem>>, %arg5: memref<16x1xf32, #tpu.memory_space<vmem>>, %arg6: memref<24x48xf32, #tpu.memory_space<vmem>>, %arg7: memref<24x1xf32, #tpu.memory_space<vmem>>, %arg8: memref<2x24x16xf32, #tpu.memory_space<vmem>>) attributes {dimension_semantics = [#tpu.dimension_semantics<parallel>], iteration_bounds = array<i64: 1>, scalar_prefetch = 0 : i64, scratch_operands = 0 : i64, tpu.core_type = #tpu.core_type<tc>, window_params = [{transform_indices = @transform_0, window_bounds = array<i64: 2, 4, 22>}, {pipeline_mode = #tpu.pipeline_mode<synchronous>, transform_indices = @transform_1, window_bounds = array<i64: 8, 12>}, {pipeline_mode = #tpu.pipeline_mode<synchronous>, transform_indices = @transform_2, window_bounds = array<i64: 8, 1>}, {pipeline_mode = #tpu.pipeline_mode<synchronous>, transform_indices = @transform_3, window_bounds = array<i64: 16, 24>}, {pipeline_mode = #tpu.pipeline_mode<synchronous>, transform_indices = @transform_4, window_bounds = array<i64: 16, 1>}, {pipeline_mode = #tpu.pipeline_mode<synchronous>, transform_indices = @transform_5, window_bounds = array<i64: 24, 48>}, {pipeline_mode = #tpu.pipeline_mode<synchronous>, transform_indices = @transform_6, window_bounds = array<i64: 24, 1>}, {transform_indices = @transform_7, window_bounds = array<i64: 2, 24, 16>}]} {
    %0 = tpu.iota {dimensions = array<i32: 1>} : vector<1x20xi32>
    %c2_i32 = arith.constant 2 : i32
    %1 = vector.broadcast %c2_i32 : i32 to vector<1x20xi32>
    %2 = arith.cmpi sge, %0, %1 : vector<1x20xi32>
    %c18_i32 = arith.constant 18 : i32
    %3 = vector.broadcast %c18_i32 : i32 to vector<1x20xi32>
    %4 = arith.cmpi slt, %0, %3 : vector<1x20xi32>
    %5 = arith.andi %2, %4 : vector<1x20xi1>
    %6 = vector.extract_strided_slice %0 {offsets = [0, 0], sizes = [1, 18], strides = [1, 1]} : vector<1x20xi32> to vector<1x18xi32>
    %c1_i32 = arith.constant 1 : i32
    %7 = vector.broadcast %c1_i32 : i32 to vector<1x18xi32>
    %8 = arith.cmpi sge, %6, %7 : vector<1x18xi32>
    %c17_i32 = arith.constant 17 : i32
    %9 = vector.broadcast %c17_i32 : i32 to vector<1x18xi32>
    %10 = arith.cmpi slt, %6, %9 : vector<1x18xi32>
    %11 = arith.andi %8, %10 : vector<1x18xi1>
    %c0 = arith.constant 0 : index
    %c0_0 = arith.constant 0 : index
    %c0_1 = arith.constant 0 : index
    %12 = vector.load %arg1[%c0, %c0_0, %c0_1] : memref<2x4x22xf32, #tpu.memory_space<vmem>>, vector<1x4x22xf32>
    %13 = vector.shape_cast %12 : vector<1x4x22xf32> to vector<4x22xf32>
    %c0_2 = arith.constant 0 : index
    %c0_3 = arith.constant 0 : index
    %14 = vector.load %arg2[%c0_2, %c0_3] : memref<8x12xf32, #tpu.memory_space<vmem>>, vector<8x12xf32>
    %15 = vector.extract_strided_slice %13 {offsets = [0, 0], sizes = [4, 20], strides = [1, 1]} : vector<4x22xf32> to vector<4x20xf32>
    %16 = vector.extract_strided_slice %13 {offsets = [0, 1], sizes = [4, 20], strides = [1, 1]} : vector<4x22xf32> to vector<4x20xf32>
    %17 = vector.extract_strided_slice %13 {offsets = [0, 2], sizes = [4, 20], strides = [1, 1]} : vector<4x22xf32> to vector<4x20xf32>
    %18 = tpu.concatenate %15, %16, %17 in 0 : vector<4x20xf32>, vector<4x20xf32>, vector<4x20xf32> -> vector<12x20xf32>
    %cst = arith.constant dense<0.000000e+00> : vector<8x20xf32>
    %19 = tpu.matmul %14, %18, %cst {dimension_numbers = #tpu.dot_dimension_numbers<[1], [0], [0], [1], [0, 0, 1, 1], [], []>} : vector<8x12xf32>, vector<12x20xf32>, vector<8x20xf32> -> vector<8x20xf32>
    %c0_4 = arith.constant 0 : index
    %c0_5 = arith.constant 0 : index
    %20 = vector.load %arg3[%c0_4, %c0_5] : memref<8x1xf32, #tpu.memory_space<vmem>>, vector<8x1xf32>
    %21 = vector.broadcast %20 : vector<8x1xf32> to vector<8x20xf32>
    %22 = arith.addf %19, %21 : vector<8x20xf32>
    %cst_6 = arith.constant 0.000000e+00 : f32
    %23 = vector.broadcast %cst_6 : f32 to vector<8x20xf32>
    %24 = arith.maximumf %22, %23 : vector<8x20xf32>
    %cst_7 = arith.constant 0.000000e+00 : f32
    %25 = vector.shape_cast %5 : vector<1x20xi1> to vector<1x20xi1>
    %26 = vector.broadcast %25 : vector<1x20xi1> to vector<8x20xi1>
    %27 = vector.broadcast %cst_7 : f32 to vector<8x20xf32>
    %28 = arith.select %26, %24, %27 : vector<8x20xi1>, vector<8x20xf32>
    %c0_8 = arith.constant 0 : index
    %c0_9 = arith.constant 0 : index
    %29 = vector.load %arg4[%c0_8, %c0_9] : memref<16x24xf32, #tpu.memory_space<vmem>>, vector<16x24xf32>
    %30 = vector.extract_strided_slice %28 {offsets = [0, 0], sizes = [8, 18], strides = [1, 1]} : vector<8x20xf32> to vector<8x18xf32>
    %31 = vector.extract_strided_slice %28 {offsets = [0, 1], sizes = [8, 18], strides = [1, 1]} : vector<8x20xf32> to vector<8x18xf32>
    %32 = vector.extract_strided_slice %28 {offsets = [0, 2], sizes = [8, 18], strides = [1, 1]} : vector<8x20xf32> to vector<8x18xf32>
    %33 = tpu.concatenate %30, %31, %32 in 0 : vector<8x18xf32>, vector<8x18xf32>, vector<8x18xf32> -> vector<24x18xf32>
    %cst_10 = arith.constant dense<0.000000e+00> : vector<16x18xf32>
    %34 = tpu.matmul %29, %33, %cst_10 {dimension_numbers = #tpu.dot_dimension_numbers<[1], [0], [0], [1], [0, 0, 1, 1], [], []>} : vector<16x24xf32>, vector<24x18xf32>, vector<16x18xf32> -> vector<16x18xf32>
    %c0_11 = arith.constant 0 : index
    %c0_12 = arith.constant 0 : index
    %35 = vector.load %arg5[%c0_11, %c0_12] : memref<16x1xf32, #tpu.memory_space<vmem>>, vector<16x1xf32>
    %36 = vector.broadcast %35 : vector<16x1xf32> to vector<16x18xf32>
    %37 = arith.addf %34, %36 : vector<16x18xf32>
    %cst_13 = arith.constant 0.000000e+00 : f32
    %38 = vector.broadcast %cst_13 : f32 to vector<16x18xf32>
    %39 = arith.maximumf %37, %38 : vector<16x18xf32>
    %cst_14 = arith.constant 0.000000e+00 : f32
    %40 = vector.shape_cast %11 : vector<1x18xi1> to vector<1x18xi1>
    %41 = vector.broadcast %40 : vector<1x18xi1> to vector<16x18xi1>
    %42 = vector.broadcast %cst_14 : f32 to vector<16x18xf32>
    %43 = arith.select %41, %39, %42 : vector<16x18xi1>, vector<16x18xf32>
    %c0_15 = arith.constant 0 : index
    %c0_16 = arith.constant 0 : index
    %44 = vector.load %arg6[%c0_15, %c0_16] : memref<24x48xf32, #tpu.memory_space<vmem>>, vector<24x48xf32>
    %45 = vector.extract_strided_slice %43 {offsets = [0, 0], sizes = [16, 16], strides = [1, 1]} : vector<16x18xf32> to vector<16x16xf32>
    %46 = vector.extract_strided_slice %43 {offsets = [0, 1], sizes = [16, 16], strides = [1, 1]} : vector<16x18xf32> to vector<16x16xf32>
    %47 = vector.extract_strided_slice %43 {offsets = [0, 2], sizes = [16, 16], strides = [1, 1]} : vector<16x18xf32> to vector<16x16xf32>
    %48 = tpu.concatenate %45, %46, %47 in 0 : vector<16x16xf32>, vector<16x16xf32>, vector<16x16xf32> -> vector<48x16xf32>
    %cst_17 = arith.constant dense<0.000000e+00> : vector<24x16xf32>
    %49 = tpu.matmul %44, %48, %cst_17 {dimension_numbers = #tpu.dot_dimension_numbers<[1], [0], [0], [1], [0, 0, 1, 1], [], []>} : vector<24x48xf32>, vector<48x16xf32>, vector<24x16xf32> -> vector<24x16xf32>
    %c0_18 = arith.constant 0 : index
    %c0_19 = arith.constant 0 : index
    %50 = vector.load %arg7[%c0_18, %c0_19] : memref<24x1xf32, #tpu.memory_space<vmem>>, vector<24x1xf32>
    %51 = vector.broadcast %50 : vector<24x1xf32> to vector<24x16xf32>
    %52 = arith.addf %49, %51 : vector<24x16xf32>
    %cst_20 = arith.constant 0.000000e+00 : f32
    %53 = vector.broadcast %cst_20 : f32 to vector<24x16xf32>
    %54 = arith.maximumf %52, %53 : vector<24x16xf32>
    %c0_21 = arith.constant 0 : index
    %c0_22 = arith.constant 0 : index
    %c0_23 = arith.constant 0 : index
    %55 = vector.load %arg8[%c0_21, %c0_22, %c0_23] : memref<2x24x16xf32, #tpu.memory_space<vmem>>, vector<1x24x16xf32>
    %56 = vector.shape_cast %55 : vector<1x24x16xf32> to vector<24x16xf32>
    %57 = vector.shape_cast %54 : vector<24x16xf32> to vector<1x24x16xf32>
    tpu.vector_store %arg8[%c0_21, %c0_22, %c0_23], %57 {strides = array<i32>} : memref<2x24x16xf32, #tpu.memory_space<vmem>>, vector<1x24x16xf32>,
    %c1 = arith.constant 1 : index
    %c0_24 = arith.constant 0 : index
    %c0_25 = arith.constant 0 : index
    %58 = vector.load %arg1[%c1, %c0_24, %c0_25] : memref<2x4x22xf32, #tpu.memory_space<vmem>>, vector<1x4x22xf32>
    %59 = vector.shape_cast %58 : vector<1x4x22xf32> to vector<4x22xf32>
    %c0_26 = arith.constant 0 : index
    %c0_27 = arith.constant 0 : index
    %60 = vector.load %arg2[%c0_26, %c0_27] : memref<8x12xf32, #tpu.memory_space<vmem>>, vector<8x12xf32>
    %61 = vector.extract_strided_slice %59 {offsets = [0, 0], sizes = [4, 20], strides = [1, 1]} : vector<4x22xf32> to vector<4x20xf32>
    %62 = vector.extract_strided_slice %59 {offsets = [0, 1], sizes = [4, 20], strides = [1, 1]} : vector<4x22xf32> to vector<4x20xf32>
    %63 = vector.extract_strided_slice %59 {offsets = [0, 2], sizes = [4, 20], strides = [1, 1]} : vector<4x22xf32> to vector<4x20xf32>
    %64 = tpu.concatenate %61, %62, %63 in 0 : vector<4x20xf32>, vector<4x20xf32>, vector<4x20xf32> -> vector<12x20xf32>
    %cst_28 = arith.constant dense<0.000000e+00> : vector<8x20xf32>
    %65 = tpu.matmul %60, %64, %cst_28 {dimension_numbers = #tpu.dot_dimension_numbers<[1], [0], [0], [1], [0, 0, 1, 1], [], []>} : vector<8x12xf32>, vector<12x20xf32>, vector<8x20xf32> -> vector<8x20xf32>
    %c0_29 = arith.constant 0 : index
    %c0_30 = arith.constant 0 : index
    %66 = vector.load %arg3[%c0_29, %c0_30] : memref<8x1xf32, #tpu.memory_space<vmem>>, vector<8x1xf32>
    %67 = vector.broadcast %66 : vector<8x1xf32> to vector<8x20xf32>
    %68 = arith.addf %65, %67 : vector<8x20xf32>
    %cst_31 = arith.constant 0.000000e+00 : f32
    %69 = vector.broadcast %cst_31 : f32 to vector<8x20xf32>
    %70 = arith.maximumf %68, %69 : vector<8x20xf32>
    %cst_32 = arith.constant 0.000000e+00 : f32
    %71 = vector.shape_cast %5 : vector<1x20xi1> to vector<1x20xi1>
    %72 = vector.broadcast %71 : vector<1x20xi1> to vector<8x20xi1>
    %73 = vector.broadcast %cst_32 : f32 to vector<8x20xf32>
    %74 = arith.select %72, %70, %73 : vector<8x20xi1>, vector<8x20xf32>
    %c0_33 = arith.constant 0 : index
    %c0_34 = arith.constant 0 : index
    %75 = vector.load %arg4[%c0_33, %c0_34] : memref<16x24xf32, #tpu.memory_space<vmem>>, vector<16x24xf32>
    %76 = vector.extract_strided_slice %74 {offsets = [0, 0], sizes = [8, 18], strides = [1, 1]} : vector<8x20xf32> to vector<8x18xf32>
    %77 = vector.extract_strided_slice %74 {offsets = [0, 1], sizes = [8, 18], strides = [1, 1]} : vector<8x20xf32> to vector<8x18xf32>
    %78 = vector.extract_strided_slice %74 {offsets = [0, 2], sizes = [8, 18], strides = [1, 1]} : vector<8x20xf32> to vector<8x18xf32>
    %79 = tpu.concatenate %76, %77, %78 in 0 : vector<8x18xf32>, vector<8x18xf32>, vector<8x18xf32> -> vector<24x18xf32>
    %cst_35 = arith.constant dense<0.000000e+00> : vector<16x18xf32>
    %80 = tpu.matmul %75, %79, %cst_35 {dimension_numbers = #tpu.dot_dimension_numbers<[1], [0], [0], [1], [0, 0, 1, 1], [], []>} : vector<16x24xf32>, vector<24x18xf32>, vector<16x18xf32> -> vector<16x18xf32>
    %c0_36 = arith.constant 0 : index
    %c0_37 = arith.constant 0 : index
    %81 = vector.load %arg5[%c0_36, %c0_37] : memref<16x1xf32, #tpu.memory_space<vmem>>, vector<16x1xf32>
    %82 = vector.broadcast %81 : vector<16x1xf32> to vector<16x18xf32>
    %83 = arith.addf %80, %82 : vector<16x18xf32>
    %cst_38 = arith.constant 0.000000e+00 : f32
    %84 = vector.broadcast %cst_38 : f32 to vector<16x18xf32>
    %85 = arith.maximumf %83, %84 : vector<16x18xf32>
    %cst_39 = arith.constant 0.000000e+00 : f32
    %86 = vector.shape_cast %11 : vector<1x18xi1> to vector<1x18xi1>
    %87 = vector.broadcast %86 : vector<1x18xi1> to vector<16x18xi1>
    %88 = vector.broadcast %cst_39 : f32 to vector<16x18xf32>
    %89 = arith.select %87, %85, %88 : vector<16x18xi1>, vector<16x18xf32>
    %c0_40 = arith.constant 0 : index
    %c0_41 = arith.constant 0 : index
    %90 = vector.load %arg6[%c0_40, %c0_41] : memref<24x48xf32, #tpu.memory_space<vmem>>, vector<24x48xf32>
    %91 = vector.extract_strided_slice %89 {offsets = [0, 0], sizes = [16, 16], strides = [1, 1]} : vector<16x18xf32> to vector<16x16xf32>
    %92 = vector.extract_strided_slice %89 {offsets = [0, 1], sizes = [16, 16], strides = [1, 1]} : vector<16x18xf32> to vector<16x16xf32>
    %93 = vector.extract_strided_slice %89 {offsets = [0, 2], sizes = [16, 16], strides = [1, 1]} : vector<16x18xf32> to vector<16x16xf32>
    %94 = tpu.concatenate %91, %92, %93 in 0 : vector<16x16xf32>, vector<16x16xf32>, vector<16x16xf32> -> vector<48x16xf32>
    %cst_42 = arith.constant dense<0.000000e+00> : vector<24x16xf32>
    %95 = tpu.matmul %90, %94, %cst_42 {dimension_numbers = #tpu.dot_dimension_numbers<[1], [0], [0], [1], [0, 0, 1, 1], [], []>} : vector<24x48xf32>, vector<48x16xf32>, vector<24x16xf32> -> vector<24x16xf32>
    %c0_43 = arith.constant 0 : index
    %c0_44 = arith.constant 0 : index
    %96 = vector.load %arg7[%c0_43, %c0_44] : memref<24x1xf32, #tpu.memory_space<vmem>>, vector<24x1xf32>
    %97 = vector.broadcast %96 : vector<24x1xf32> to vector<24x16xf32>
    %98 = arith.addf %95, %97 : vector<24x16xf32>
    %cst_45 = arith.constant 0.000000e+00 : f32
    %99 = vector.broadcast %cst_45 : f32 to vector<24x16xf32>
    %100 = arith.maximumf %98, %99 : vector<24x16xf32>
    %c1_46 = arith.constant 1 : index
    %c0_47 = arith.constant 0 : index
    %c0_48 = arith.constant 0 : index
    %101 = vector.load %arg8[%c1_46, %c0_47, %c0_48] : memref<2x24x16xf32, #tpu.memory_space<vmem>>, vector<1x24x16xf32>
    %102 = vector.shape_cast %101 : vector<1x24x16xf32> to vector<24x16xf32>
    %103 = vector.shape_cast %100 : vector<24x16xf32> to vector<1x24x16xf32>
    tpu.vector_store %arg8[%c1_46, %c0_47, %c0_48], %103 {strides = array<i32>} : memref<2x24x16xf32, #tpu.memory_space<vmem>>, vector<1x24x16xf32>,
    return
  }
  func.func @transform_0(%arg0: i32) -> (i32, i32, i32) {
    %c0_i32 = arith.constant 0 : i32
    %c0_i32_0 = arith.constant 0 : i32
    %c0_i32_1 = arith.constant 0 : i32
    return %arg0, %c0_i32, %c0_i32_0 : i32, i32, i32
  }
  func.func @transform_1(%arg0: i32) -> (i32, i32) {
    %c0_i32 = arith.constant 0 : i32
    %c0_i32_0 = arith.constant 0 : i32
    %c0_i32_1 = arith.constant 0 : i32
    return %c0_i32, %c0_i32_0 : i32, i32
  }
  func.func @transform_2(%arg0: i32) -> (i32, i32) {
    %c0_i32 = arith.constant 0 : i32
    %c0_i32_0 = arith.constant 0 : i32
    %c0_i32_1 = arith.constant 0 : i32
    return %c0_i32, %c0_i32_0 : i32, i32
  }
  func.func @transform_3(%arg0: i32) -> (i32, i32) {
    %c0_i32 = arith.constant 0 : i32
    %c0_i32_0 = arith.constant 0 : i32
    %c0_i32_1 = arith.constant 0 : i32
    return %c0_i32, %c0_i32_0 : i32, i32
  }
  func.func @transform_4(%arg0: i32) -> (i32, i32) {
    %c0_i32 = arith.constant 0 : i32
    %c0_i32_0 = arith.constant 0 : i32
    %c0_i32_1 = arith.constant 0 : i32
    return %c0_i32, %c0_i32_0 : i32, i32
  }
  func.func @transform_5(%arg0: i32) -> (i32, i32) {
    %c0_i32 = arith.constant 0 : i32
    %c0_i32_0 = arith.constant 0 : i32
    %c0_i32_1 = arith.constant 0 : i32
    return %c0_i32, %c0_i32_0 : i32, i32
  }
  func.func @transform_6(%arg0: i32) -> (i32, i32) {
    %c0_i32 = arith.constant 0 : i32
    %c0_i32_0 = arith.constant 0 : i32
    %c0_i32_1 = arith.constant 0 : i32
    return %c0_i32, %c0_i32_0 : i32, i32
  }
  func.func @transform_7(%arg0: i32) -> (i32, i32, i32) {
    %c0_i32 = arith.constant 0 : i32
    %c0_i32_0 = arith.constant 0 : i32
    %c0_i32_1 = arith.constant 0 : i32
    return %arg0, %c0_i32, %c0_i32_0 : i32, i32, i32
  }
}

</mosaic_0001>

<llo_original>
// kernel: tpu_custom_call.1
$region0: #{tpu_custom_call.1}
  #allocation0 [shape = 'u32[]', space=smem, size = 0x4, offset = 0x4, fixed_abs, tag = 'smem constant byte address 0x4 - core index']
  #allocation1 [shape = 'u32[144,128]{1,0:T(1,128)}', space=vmem, size = 0x12000, scoped, tag = 'internal scratch']
  %s0 = inlined_call_operand.vmem [shape: f32[2,4,22], index: 0, kind: input, shape index: {}]
  %s1 = inlined_call_operand.hbm [shape: f32[8,12], index: 1, kind: input, shape index: {}]
  %s2 = inlined_call_operand.vmem [shape: f32[8,1], index: 2, kind: input, shape index: {}]
  %s3 = inlined_call_operand.vmem [shape: f32[16,24], index: 3, kind: input, shape index: {}]
  %s4 = inlined_call_operand.vmem [shape: f32[16,1], index: 4, kind: input, shape index: {}]
  %s5 = inlined_call_operand.vmem [shape: f32[24,48], index: 5, kind: input, shape index: {}]
  %s6 = inlined_call_operand.vmem [shape: f32[24,1], index: 6, kind: input, shape index: {}]
  %s7 = inlined_call_operand.vmem [shape: f32[2,24,16], index: 7, kind: output, shape index: {}]
  %s8 = sld [smem:[#allocation0]]
  $region42: #{tpu_custom_call.1} parent=0
    _
  %s10 = ssub.s32 1, %s8
  %s11 = scalar_select 0, %s10, %s8
  $region1: #{tpu_custom_call.1} parent=0
    #allocation2 [shape = 'u8[4096]{0}', space=vmem, size = 0x1000, scoped, tag = 'input window, operand 1, single buffered']
    #allocation3 [shape = 's32[1]{0}', space=sflag, size = 0x4, scoped, tag = 'scoped memory for tpu_custom_call.1']
    %12 = vsyncpa [#allocation3], 0
    // Predicated region
    $region2: #{tpu_custom_call.1} parent=1 // pred_check
      _
    $region3: #{tpu_custom_call.1} parent=1 // pred_check_branch
      %14 = sbr.rel (0) target = $region5
    $region4: #{tpu_custom_call.1} parent=1 // pred_region
      _
    $region5: #{tpu_custom_call.1} parent=1 // pred_fallthru
      _
    // Predicated region
    $region6: #{tpu_custom_call.1} parent=1 // pred_check
      _
    $region7: #{tpu_custom_call.1} parent=1 // pred_check_branch
      %16 = sbr.rel (0) target = $region9
    $region8: #{tpu_custom_call.1} parent=1 // pred_region
      %s18 = ssub.s32 128, 128
      %19 = vsyncadd [#allocation3], %s18
      %s21 = sshll.u32 [#allocation2], 4
      %s22 = int_to_ptr.vmem [resolvable:$true] %s21
      %24 = dma.hbm_to_vmem [thread:$0]  %s1, 128, %s22, [#allocation3]
    $region9: #{tpu_custom_call.1} parent=1 // pred_fallthru
      _
    // Predicated region
    $region10: #{tpu_custom_call.1} parent=1 // pred_check
      _
    $region11: #{tpu_custom_call.1} parent=1 // pred_check_branch
      %26 = sbr.rel (0) target = $region13
    $region12: #{tpu_custom_call.1} parent=1 // pred_region
      _
    $region13: #{tpu_custom_call.1} parent=1 // pred_fallthru
      _
    // Predicated region
    $region14: #{tpu_custom_call.1} parent=1 // pred_check
      _
    $region15: #{tpu_custom_call.1} parent=1 // pred_check_branch
      %28 = sbr.rel (0) target = $region17
    $region16: #{tpu_custom_call.1} parent=1 // pred_region
      _
    $region17: #{tpu_custom_call.1} parent=1 // pred_fallthru
      _
    // Predicated region
    $region18: #{tpu_custom_call.1} parent=1 // pred_check
      _
    $region19: #{tpu_custom_call.1} parent=1 // pred_check_branch
      %30 = sbr.rel (0) target = $region21
    $region20: #{tpu_custom_call.1} parent=1 // pred_region
      _
    $region21: #{tpu_custom_call.1} parent=1 // pred_fallthru
      _
    // Predicated region
    $region22: #{tpu_custom_call.1} parent=1 // pred_check
      _
    $region23: #{tpu_custom_call.1} parent=1 // pred_check_branch
      %32 = sbr.rel (0) target = $region25
    $region24: #{tpu_custom_call.1} parent=1 // pred_region
      _
    $region25: #{tpu_custom_call.1} parent=1 // pred_fallthru
      _
    // Predicated region
    $region26: #{tpu_custom_call.1} parent=1 // pred_check
      _
    $region27: #{tpu_custom_call.1} parent=1 // pred_check_branch
      %34 = sbr.rel (0) target = $region29
    $region28: #{tpu_custom_call.1} parent=1 // pred_region
      _
    $region29: #{tpu_custom_call.1} parent=1 // pred_fallthru
      _
    // Predicated region
    $region30: #{tpu_custom_call.1} parent=1 // pred_check
      _
    $region31: #{tpu_custom_call.1} parent=1 // pred_check_branch
      %36 = sbr.rel (0) target = $region33
    $region32: #{tpu_custom_call.1} parent=1 // pred_region
      %37 = dma.done [#allocation3], 128
    $region33: #{tpu_custom_call.1} parent=1 // pred_fallthru
      _
    %v38 = vlaneseq
    %v39 = vand.u32 %v38, 127
    %vm40 = vcmp.ge.s32.totalorder %v39, 2
    %vm41 = vcmp.lt.s32.totalorder %v39, 18
    %vm42 = vmand %vm40, %vm41
    %vm43 = vcmp.ge.s32.totalorder %v39, 1
    %vm44 = vcmp.lt.s32.totalorder %v39, 17
    %vm45 = vmand %vm43, %vm44
    %v46 = vld [vmem:[%s0] sm:$0xf]
    %v47 = vld [vmem:[#allocation2] sm:$0xff]
    %v49 = vrot.slane %v46, 4
    %50 = vrot.lane.b32.xlu0 %v49, 127
    %v51 = vpop.permute.xlu0 %50
    %53 = vrot.lane.b32.xlu0 %v46, 126
    %v54 = vpop.permute.xlu0 %53
    %vm55 = vcmask 1043456
    %v56 = vsel %vm55, %v46, %v51
    %v57 = vld [vmem:[%s2] sm:$0xff]
    %59 = vset.pattern.permute.xlu0 0
    %60 = vperm.xlu0 %59, %v57
    %v61 = vpop.permute.xlu0 %60
    %vm63 = vcmask 97280
    %v65 = vsel %vm63, %v47, 0
    %v67 = vsel %vm55, %v54, 0
    %69 = vmatprep.subr.mxu0 0.0
    %70 = vmatpush1.msra.mxu0 %v56
    %71 = vmatprep.subr.mxu0 0.0
    %72 = vmatpush1.msra.mxu0 %v67
    %73 = vmatprep.subr.mxu0 0.0
    %74 = vmatpush1.msra.mxu0 0.0
    %75 = vmatprep.subr.mxu0 0.0
    %76 = vmatpush1.msra.mxu0 0.0
    %77 = vmatprep.subr.mxu0 0.0
    %78 = vmatpush1.msra.mxu0 0.0
    %79 = vmatprep.subr.mxu0 0.0
    %80 = vmatpush1.msra.mxu0 0.0
    %81 = vmatprep.subr.mxu0 0.0
    %82 = vmatpush1.msra.mxu0 0.0
    %83 = vmatprep.subr.mxu0 0.0
    %84 = vmatpush1.msra.mxu0 0.0
    %85 = vmatprep.subr.mxu0 0.0
    %86 = vmatpush1.msra.mxu0 0.0
    %87 = vmatprep.subr.mxu0 0.0
    %88 = vmatpush1.msra.mxu0 0.0
    %89 = vmatprep.subr.mxu0 0.0
    %90 = vmatpush1.msra.mxu0 0.0
    %91 = vmatprep.subr.mxu0 0.0
    %92 = vmatpush1.msra.mxu0 0.0
    %93 = vmatprep.subr.mxu0 0.0
    %94 = vmatpush1.msra.mxu0 0.0
    %95 = vmatprep.subr.mxu0 0.0
    %96 = vmatpush1.msra.mxu0 0.0
    %97 = vmatprep.subr.mxu0 0.0
    %98 = vmatpush1.msra.mxu0 0.0
    %99 = vmatprep.subr.mxu0 0.0
    %100 = vmatpush1.msra.mxu0 0.0
    %101 = vmatprep.subr.mxu0 0.0
    %102 = vmatpush1.msra.mxu0 0.0
    %103 = vmatprep.subr.mxu0 0.0
    %104 = vmatpush1.msra.mxu0 0.0
    %105 = vmatprep.subr.mxu0 0.0
    %106 = vmatpush1.msra.mxu0 0.0
    %107 = vmatprep.subr.mxu0 0.0
    %108 = vmatpush1.msra.mxu0 0.0
    %109 = vmatprep.subr.mxu0 0.0
    %110 = vmatpush1.msra.mxu0 0.0
    %111 = vmatprep.subr.mxu0 0.0
    %112 = vmatpush1.msra.mxu0 0.0
    %113 = vmatprep.subr.mxu0 0.0
    %114 = vmatpush1.msra.mxu0 0.0
    %115 = vmatprep.subr.mxu0 0.0
    %116 = vmatpush1.msra.mxu0 0.0
    %117 = vmatprep.subr.mxu0 0.0
    %118 = vmatpush1.msra.mxu0 0.0
    %119 = vmatprep.subr.mxu0 0.0
    %120 = vmatpush1.msra.mxu0 0.0
    %121 = vmatprep.subr.mxu0 0.0
    %122 = vmatpush1.msra.mxu0 0.0
    %123 = vmatprep.subr.mxu0 0.0
    %124 = vmatpush1.msra.mxu0 0.0
    %125 = vmatprep.subr.mxu0 0.0
    %126 = vmatpush1.msra.mxu0 0.0
    %127 = vmatprep.subr.mxu0 0.0
    %128 = vmatpush1.msra.mxu0 0.0
    %129 = vmatprep.subr.mxu0 0.0
    %130 = vmatpush1.msra.mxu0 0.0
    %131 = vmatprep.subr.mxu0 0.0
    %132 = vmatpush1.msra.mxu0 0.0
    %133 = vmatprep.mubr.f32.mxu0 0.0
    %134 = vmatmul.mubr.f32.gmra.mrb[0].mxu0 %v65
    %v135 = vpop.f32.mrb[0].mxu0
    %v136 = vadd.f32 %v61, %v135
    %v137 = vpop.f32.mrb[0].mxu0
    %138 = vdwg.mxu0
    %v139 = vmax.f32 %v136, 0.0
    %v140 = vsel %vm42, 1, 0
    %vm141 = vcmp.eq.s32.totalorder %v140, 1
    %v142 = vsel %vm141, %v139, 0.0
    %v143 = vld [vmem:[%s3] sm:$0xff]
    %v144 = vld [vmem:[%s3 + $0x8] sm:$0xff]
    %146 = vrot.lane.b32.xlu0 %v142, 127
    %v147 = vpop.permute.xlu0 %146
    %149 = vrot.lane.b32.xlu0 %v142, 126
    %v150 = vpop.permute.xlu0 %149
    %v152 = vld [vmem:[%s4] sm:$0xff]
    %v153 = vld [vmem:[%s4 + $0x8] sm:$0xff]
    %155 = vset.pattern.permute.xlu0 0
    %156 = vperm.xlu0 %155, %v152
    %v157 = vpop.permute.xlu0 %156
    %160 = vset.pattern.permute.xlu0 0
    %161 = vperm.xlu0 %160, %v153
    %v162 = vpop.permute.xlu0 %161
    %vm164 = vcmask 195584
    %v166 = vsel %vm164, %v143, 0
    %v169 = vsel %vm164, %v144, 0
    %171 = vmatprep.subr.mxu0 0.0
    %172 = vmatpush1.msra.mxu0 %v142
    %173 = vmatprep.subr.mxu0 0.0
    %174 = vmatpush1.msra.mxu0 %v147
    %175 = vmatprep.subr.mxu0 0.0
    %176 = vmatpush1.msra.mxu0 %v150
    %177 = vmatprep.subr.mxu0 0.0
    %178 = vmatpush1.msra.mxu0 0.0
    %179 = vmatprep.subr.mxu0 0.0
    %180 = vmatpush1.msra.mxu0 0.0
    %181 = vmatprep.subr.mxu0 0.0
    %182 = vmatpush1.msra.mxu0 0.0
    %183 = vmatprep.subr.mxu0 0.0
    %184 = vmatpush1.msra.mxu0 0.0
    %185 = vmatprep.subr.mxu0 0.0
    %186 = vmatpush1.msra.mxu0 0.0
    %187 = vmatprep.subr.mxu0 0.0
    %188 = vmatpush1.msra.mxu0 0.0
    %189 = vmatprep.subr.mxu0 0.0
    %190 = vmatpush1.msra.mxu0 0.0
    %191 = vmatprep.subr.mxu0 0.0
    %192 = vmatpush1.msra.mxu0 0.0
    %193 = vmatprep.subr.mxu0 0.0
    %194 = vmatpush1.msra.mxu0 0.0
    %195 = vmatprep.subr.mxu0 0.0
    %196 = vmatpush1.msra.mxu0 0.0
    %197 = vmatprep.subr.mxu0 0.0
    %198 = vmatpush1.msra.mxu0 0.0
    %199 = vmatprep.subr.mxu0 0.0
    %200 = vmatpush1.msra.mxu0 0.0
    %201 = vmatprep.subr.mxu0 0.0
    %202 = vmatpush1.msra.mxu0 0.0
    %203 = vmatprep.subr.mxu0 0.0
    %204 = vmatpush1.msra.mxu0 0.0
    %205 = vmatprep.subr.mxu0 0.0
    %206 = vmatpush1.msra.mxu0 0.0
    %207 = vmatprep.subr.mxu0 0.0
    %208 = vmatpush1.msra.mxu0 0.0
    %209 = vmatprep.subr.mxu0 0.0
    %210 = vmatpush1.msra.mxu0 0.0
    %211 = vmatprep.subr.mxu0 0.0
    %212 = vmatpush1.msra.mxu0 0.0
    %213 = vmatprep.subr.mxu0 0.0
    %214 = vmatpush1.msra.mxu0 0.0
    %215 = vmatprep.subr.mxu0 0.0
    %216 = vmatpush1.msra.mxu0 0.0
    %217 = vmatprep.subr.mxu0 0.0
    %218 = vmatpush1.msra.mxu0 0.0
    %219 = vmatprep.subr.mxu0 0.0
    %220 = vmatpush1.msra.mxu0 0.0
    %221 = vmatprep.subr.mxu0 0.0
    %222 = vmatpush1.msra.mxu0 0.0
    %223 = vmatprep.subr.mxu0 0.0
    %224 = vmatpush1.msra.mxu0 0.0
    %225 = vmatprep.subr.mxu0 0.0
    %226 = vmatpush1.msra.mxu0 0.0
    %227 = vmatprep.subr.mxu0 0.0
    %228 = vmatpush1.msra.mxu0 0.0
    %229 = vmatprep.subr.mxu0 0.0
    %230 = vmatpush1.msra.mxu0 0.0
    %231 = vmatprep.subr.mxu0 0.0
    %232 = vmatpush1.msra.mxu0 0.0
    %233 = vmatprep.subr.mxu0 0.0
    %234 = vmatpush1.msra.mxu0 0.0
    %235 = vmatprep.mubr.f32.mxu0 0.0
    %236 = vmatmul.mubr.f32.gmra.mrb[0].mxu0 %v166
    %v237 = vpop.f32.mrb[0].mxu0
    %v238 = vadd.f32 %v157, %v237
    %v239 = vpop.f32.mrb[0].mxu0
    %240 = vmatprep.mubr.f32.mxu0 0.0
    %241 = vmatmul.mubr.f32.gmra.mrb[0].mxu0 %v169
    %v242 = vpop.f32.mrb[0].mxu0
    %v243 = vadd.f32 %v162, %v242
    %v244 = vpop.f32.mrb[0].mxu0
    %245 = vdwg.mxu0
    %v246 = vmax.f32 %v238, 0.0
    %v247 = vmax.f32 %v243, 0.0
    %v248 = vsel %vm45, 1, 0
    %vm249 = vcmp.eq.s32.totalorder %v248, 1
    %v250 = vsel %vm249, %v246, 0.0
    %v251 = vsel %vm249, %v247, 0.0
    %v252 = vld [vmem:[%s5] sm:$0xff]
    %v253 = vld [vmem:[%s5 + $0x8] sm:$0xff]
    %v254 = vld [vmem:[%s5 + $0x10] sm:$0xff]
    %257 = vrot.lane.b32.xlu0 %v250, 127
    %v258 = vpop.permute.xlu0 %257
    %259 = vrot.lane.b32.xlu0 %v251, 127
    %v260 = vpop.permute.xlu0 %259
    %263 = vrot.lane.b32.xlu0 %v250, 126
    %v264 = vpop.permute.xlu0 %263
    %265 = vrot.lane.b32.xlu0 %v251, 126
    %v266 = vpop.permute.xlu0 %265
    %v269 = vld [vmem:[%s6] sm:$0xff]
    %v270 = vld [vmem:[%s6 + $0x8] sm:$0xff]
    %v271 = vld [vmem:[%s6 + $0x10] sm:$0xff]
    %273 = vset.pattern.permute.xlu0 0
    %274 = vperm.xlu0 %273, %v269
    %v275 = vpop.permute.xlu0 %274
    %278 = vset.pattern.permute.xlu0 0
    %279 = vperm.xlu0 %278, %v270
    %v280 = vpop.permute.xlu0 %279
    %283 = vset.pattern.permute.xlu0 0
    %284 = vperm.xlu0 %283, %v271
    %v285 = vpop.permute.xlu0 %284
    %vm287 = vcmask 392192
    %v289 = vsel %vm287, %v252, 0
    %v292 = vsel %vm287, %v253, 0
    %v295 = vsel %vm287, %v254, 0
    %297 = vmatprep.subr.mxu0 0.0
    %298 = vmatpush1.msra.mxu0 %v250
    %299 = vmatprep.subr.mxu0 0.0
    %300 = vmatpush1.msra.mxu0 %v251
    %301 = vmatprep.subr.mxu0 0.0
    %302 = vmatpush1.msra.mxu0 %v258
    %303 = vmatprep.subr.mxu0 0.0
    %304 = vmatpush1.msra.mxu0 %v260
    %305 = vmatprep.subr.mxu0 0.0
    %306 = vmatpush1.msra.mxu0 %v264
    %307 = vmatprep.subr.mxu0 0.0
    %308 = vmatpush1.msra.mxu0 %v266
    %309 = vmatprep.subr.mxu0 0.0
    %310 = vmatpush1.msra.mxu0 0.0
    %311 = vmatprep.subr.mxu0 0.0
    %312 = vmatpush1.msra.mxu0 0.0
    %313 = vmatprep.subr.mxu0 0.0
    %314 = vmatpush1.msra.mxu0 0.0
    %315 = vmatprep.subr.mxu0 0.0
    %316 = vmatpush1.msra.mxu0 0.0
    %317 = vmatprep.subr.mxu0 0.0
    %318 = vmatpush1.msra.mxu0 0.0
    %319 = vmatprep.subr.mxu0 0.0
    %320 = vmatpush1.msra.mxu0 0.0
    %321 = vmatprep.subr.mxu0 0.0
    %322 = vmatpush1.msra.mxu0 0.0
    %323 = vmatprep.subr.mxu0 0.0
    %324 = vmatpush1.msra.mxu0 0.0
    %325 = vmatprep.subr.mxu0 0.0
    %326 = vmatpush1.msra.mxu0 0.0
    %327 = vmatprep.subr.mxu0 0.0
    %328 = vmatpush1.msra.mxu0 0.0
    %329 = vmatprep.subr.mxu0 0.0
    %330 = vmatpush1.msra.mxu0 0.0
    %331 = vmatprep.subr.mxu0 0.0
    %332 = vmatpush1.msra.mxu0 0.0
    %333 = vmatprep.subr.mxu0 0.0
    %334 = vmatpush1.msra.mxu0 0.0
    %335 = vmatprep.subr.mxu0 0.0
    %336 = vmatpush1.msra.mxu0 0.0
    %337 = vmatprep.subr.mxu0 0.0
    %338 = vmatpush1.msra.mxu0 0.0
    %339 = vmatprep.subr.mxu0 0.0
    %340 = vmatpush1.msra.mxu0 0.0
    %341 = vmatprep.subr.mxu0 0.0
    %342 = vmatpush1.msra.mxu0 0.0
    %343 = vmatprep.subr.mxu0 0.0
    %344 = vmatpush1.msra.mxu0 0.0
    %345 = vmatprep.subr.mxu0 0.0
    %346 = vmatpush1.msra.mxu0 0.0
    %347 = vmatprep.subr.mxu0 0.0
    %348 = vmatpush1.msra.mxu0 0.0
    %349 = vmatprep.subr.mxu0 0.0
    %350 = vmatpush1.msra.mxu0 0.0
    %351 = vmatprep.subr.mxu0 0.0
    %352 = vmatpush1.msra.mxu0 0.0
    %353 = vmatprep.subr.mxu0 0.0
    %354 = vmatpush1.msra.mxu0 0.0
    %355 = vmatprep.subr.mxu0 0.0
    %356 = vmatpush1.msra.mxu0 0.0
    %357 = vmatprep.subr.mxu0 0.0
    %358 = vmatpush1.msra.mxu0 0.0
    %359 = vmatprep.subr.mxu0 0.0
    %360 = vmatpush1.msra.mxu0 0.0
    %361 = vmatprep.mubr.f32.mxu0 0.0
    %362 = vmatmul.mubr.f32.gmra.mrb[0].mxu0 %v289
    %v363 = vpop.f32.mrb[0].mxu0
    %v364 = vadd.f32 %v275, %v363
    %v365 = vpop.f32.mrb[0].mxu0
    %366 = vmatprep.mubr.f32.mxu0 0.0
    %367 = vmatmul.mubr.f32.gmra.mrb[0].mxu0 %v292
    %v368 = vpop.f32.mrb[0].mxu0
    %v369 = vadd.f32 %v280, %v368
    %v370 = vpop.f32.mrb[0].mxu0
    %371 = vmatprep.mubr.f32.mxu0 0.0
    %372 = vmatmul.mubr.f32.gmra.mrb[0].mxu0 %v295
    %v373 = vpop.f32.mrb[0].mxu0
    %v374 = vadd.f32 %v285, %v373
    %v375 = vpop.f32.mrb[0].mxu0
    %376 = vdwg.mxu0
    %v377 = vmax.f32 %v364, 0.0
    %v378 = vmax.f32 %v369, 0.0
    %v379 = vmax.f32 %v374, 0.0
    %vm380 = vcmask 130048
    %381 = vst.msk [vmem:[%s7] sm:$0xff] %vm380, %v377
    %382 = vst.msk [vmem:[%s7 + $0x8] sm:$0xff] %vm380, %v378
    %383 = vst.msk [vmem:[%s7 + $0x10] sm:$0xff] %vm380, %v379
    %s384 = scalar_lea.vmem %s0, 4
    %v385 = vld [vmem:[%s384] sm:$0xf]
    %v386 = vld [vmem:[#allocation2] sm:$0xff]
    %v388 = vrot.slane %v385, 4
    %389 = vrot.lane.b32.xlu0 %v388, 127
    %v390 = vpop.permute.xlu0 %389
    %392 = vrot.lane.b32.xlu0 %v385, 126
    %v393 = vpop.permute.xlu0 %392
    %v394 = vsel %vm55, %v385, %v390
    %v395 = vld [vmem:[%s2] sm:$0xff]
    %397 = vset.pattern.permute.xlu0 0
    %398 = vperm.xlu0 %397, %v395
    %v399 = vpop.permute.xlu0 %398
    %v402 = vsel %vm63, %v386, 0
    %v404 = vsel %vm55, %v393, 0
    %406 = vmatprep.subr.mxu0 0.0
    %407 = vmatpush1.msra.mxu0 %v394
    %408 = vmatprep.subr.mxu0 0.0
    %409 = vmatpush1.msra.mxu0 %v404
    %410 = vmatprep.subr.mxu0 0.0
    %411 = vmatpush1.msra.mxu0 0.0
    %412 = vmatprep.subr.mxu0 0.0
    %413 = vmatpush1.msra.mxu0 0.0
    %414 = vmatprep.subr.mxu0 0.0
    %415 = vmatpush1.msra.mxu0 0.0
    %416 = vmatprep.subr.mxu0 0.0
    %417 = vmatpush1.msra.mxu0 0.0
    %418 = vmatprep.subr.mxu0 0.0
    %419 = vmatpush1.msra.mxu0 0.0
    %420 = vmatprep.subr.mxu0 0.0
    %421 = vmatpush1.msra.mxu0 0.0
    %422 = vmatprep.subr.mxu0 0.0
    %423 = vmatpush1.msra.mxu0 0.0
    %424 = vmatprep.subr.mxu0 0.0
    %425 = vmatpush1.msra.mxu0 0.0
    %426 = vmatprep.subr.mxu0 0.0
    %427 = vmatpush1.msra.mxu0 0.0
    %428 = vmatprep.subr.mxu0 0.0
    %429 = vmatpush1.msra.mxu0 0.0
    %430 = vmatprep.subr.mxu0 0.0
    %431 = vmatpush1.msra.mxu0 0.0
    %432 = vmatprep.subr.mxu0 0.0
    %433 = vmatpush1.msra.mxu0 0.0
    %434 = vmatprep.subr.mxu0 0.0
    %435 = vmatpush1.msra.mxu0 0.0
    %436 = vmatprep.subr.mxu0 0.0
    %437 = vmatpush1.msra.mxu0 0.0
    %438 = vmatprep.subr.mxu0 0.0
    %439 = vmatpush1.msra.mxu0 0.0
    %440 = vmatprep.subr.mxu0 0.0
    %441 = vmatpush1.msra.mxu0 0.0
    %442 = vmatprep.subr.mxu0 0.0
    %443 = vmatpush1.msra.mxu0 0.0
    %444 = vmatprep.subr.mxu0 0.0
    %445 = vmatpush1.msra.mxu0 0.0
    %446 = vmatprep.subr.mxu0 0.0
    %447 = vmatpush1.msra.mxu0 0.0
    %448 = vmatprep.subr.mxu0 0.0
    %449 = vmatpush1.msra.mxu0 0.0
    %450 = vmatprep.subr.mxu0 0.0
    %451 = vmatpush1.msra.mxu0 0.0
    %452 = vmatprep.subr.mxu0 0.0
    %453 = vmatpush1.msra.mxu0 0.0
    %454 = vmatprep.subr.mxu0 0.0
    %455 = vmatpush1.msra.mxu0 0.0
    %456 = vmatprep.subr.mxu0 0.0
    %457 = vmatpush1.msra.mxu0 0.0
    %458 = vmatprep.subr.mxu0 0.0
    %459 = vmatpush1.msra.mxu0 0.0
    %460 = vmatprep.subr.mxu0 0.0
    %461 = vmatpush1.msra.mxu0 0.0
    %462 = vmatprep.subr.mxu0 0.0
    %463 = vmatpush1.msra.mxu0 0.0
    %464 = vmatprep.subr.mxu0 0.0
    %465 = vmatpush1.msra.mxu0 0.0
    %466 = vmatprep.subr.mxu0 0.0
    %467 = vmatpush1.msra.mxu0 0.0
    %468 = vmatprep.subr.mxu0 0.0
    %469 = vmatpush1.msra.mxu0 0.0
    %470 = vmatprep.mubr.f32.mxu0 0.0
    %471 = vmatmul.mubr.f32.gmra.mrb[0].mxu0 %v402
    %v472 = vpop.f32.mrb[0].mxu0
    %v473 = vadd.f32 %v399, %v472
    %v474 = vpop.f32.mrb[0].mxu0
    %475 = vdwg.mxu0
    %v476 = vmax.f32 %v473, 0.0
    %v477 = vsel %vm141, %v476, 0.0
    %v478 = vld [vmem:[%s3] sm:$0xff]
    %v479 = vld [vmem:[%s3 + $0x8] sm:$0xff]
    %481 = vrot.lane.b32.xlu0 %v477, 127
    %v482 = vpop.permute.xlu0 %481
    %484 = vrot.lane.b32.xlu0 %v477, 126
    %v485 = vpop.permute.xlu0 %484
    %v487 = vld [vmem:[%s4] sm:$0xff]
    %v488 = vld [vmem:[%s4 + $0x8] sm:$0xff]
    %490 = vset.pattern.permute.xlu0 0
    %491 = vperm.xlu0 %490, %v487
    %v492 = vpop.permute.xlu0 %491
    %495 = vset.pattern.permute.xlu0 0
    %496 = vperm.xlu0 %495, %v488
    %v497 = vpop.permute.xlu0 %496
    %v500 = vsel %vm164, %v478, 0
    %v503 = vsel %vm164, %v479, 0
    %505 = vmatprep.subr.mxu0 0.0
    %506 = vmatpush1.msra.mxu0 %v477
    %507 = vmatprep.subr.mxu0 0.0
    %508 = vmatpush1.msra.mxu0 %v482
    %509 = vmatprep.subr.mxu0 0.0
    %510 = vmatpush1.msra.mxu0 %v485
    %511 = vmatprep.subr.mxu0 0.0
    %512 = vmatpush1.msra.mxu0 0.0
    %513 = vmatprep.subr.mxu0 0.0
    %514 = vmatpush1.msra.mxu0 0.0
    %515 = vmatprep.subr.mxu0 0.0
    %516 = vmatpush1.msra.mxu0 0.0
    %517 = vmatprep.subr.mxu0 0.0
    %518 = vmatpush1.msra.mxu0 0.0
    %519 = vmatprep.subr.mxu0 0.0
    %520 = vmatpush1.msra.mxu0 0.0
    %521 = vmatprep.subr.mxu0 0.0
    %522 = vmatpush1.msra.mxu0 0.0
    %523 = vmatprep.subr.mxu0 0.0
    %524 = vmatpush1.msra.mxu0 0.0
    %525 = vmatprep.subr.mxu0 0.0
    %526 = vmatpush1.msra.mxu0 0.0
    %527 = vmatprep.subr.mxu0 0.0
    %528 = vmatpush1.msra.mxu0 0.0
    %529 = vmatprep.subr.mxu0 0.0
    %530 = vmatpush1.msra.mxu0 0.0
    %531 = vmatprep.subr.mxu0 0.0
    %532 = vmatpush1.msra.mxu0 0.0
    %533 = vmatprep.subr.mxu0 0.0
    %534 = vmatpush1.msra.mxu0 0.0
    %535 = vmatprep.subr.mxu0 0.0
    %536 = vmatpush1.msra.mxu0 0.0
    %537 = vmatprep.subr.mxu0 0.0
    %538 = vmatpush1.msra.mxu0 0.0
    %539 = vmatprep.subr.mxu0 0.0
    %540 = vmatpush1.msra.mxu0 0.0
    %541 = vmatprep.subr.mxu0 0.0
    %542 = vmatpush1.msra.mxu0 0.0
    %543 = vmatprep.subr.mxu0 0.0
    %544 = vmatpush1.msra.mxu0 0.0
    %545 = vmatprep.subr.mxu0 0.0
    %546 = vmatpush1.msra.mxu0 0.0
    %547 = vmatprep.subr.mxu0 0.0
    %548 = vmatpush1.msra.mxu0 0.0
    %549 = vmatprep.subr.mxu0 0.0
    %550 = vmatpush1.msra.mxu0 0.0
    %551 = vmatprep.subr.mxu0 0.0
    %552 = vmatpush1.msra.mxu0 0.0
    %553 = vmatprep.subr.mxu0 0.0
    %554 = vmatpush1.msra.mxu0 0.0
    %555 = vmatprep.subr.mxu0 0.0
    %556 = vmatpush1.msra.mxu0 0.0
    %557 = vmatprep.subr.mxu0 0.0
    %558 = vmatpush1.msra.mxu0 0.0
    %559 = vmatprep.subr.mxu0 0.0
    %560 = vmatpush1.msra.mxu0 0.0
    %561 = vmatprep.subr.mxu0 0.0
    %562 = vmatpush1.msra.mxu0 0.0
    %563 = vmatprep.subr.mxu0 0.0
    %564 = vmatpush1.msra.mxu0 0.0
    %565 = vmatprep.subr.mxu0 0.0
    %566 = vmatpush1.msra.mxu0 0.0
    %567 = vmatprep.subr.mxu0 0.0
    %568 = vmatpush1.msra.mxu0 0.0
    %569 = vmatprep.mubr.f32.mxu0 0.0
    %570 = vmatmul.mubr.f32.gmra.mrb[0].mxu0 %v500
    %v571 = vpop.f32.mrb[0].mxu0
    %v572 = vadd.f32 %v492, %v571
    %v573 = vpop.f32.mrb[0].mxu0
    %574 = vmatprep.mubr.f32.mxu0 0.0
    %575 = vmatmul.mubr.f32.gmra.mrb[0].mxu0 %v503
    %v576 = vpop.f32.mrb[0].mxu0
    %v577 = vadd.f32 %v497, %v576
    %v578 = vpop.f32.mrb[0].mxu0
    %579 = vdwg.mxu0
    %v580 = vmax.f32 %v572, 0.0
    %v581 = vmax.f32 %v577, 0.0
    %v582 = vsel %vm249, %v580, 0.0
    %v583 = vsel %vm249, %v581, 0.0
    %v584 = vld [vmem:[%s5] sm:$0xff]
    %v585 = vld [vmem:[%s5 + $0x8] sm:$0xff]
    %v586 = vld [vmem:[%s5 + $0x10] sm:$0xff]
    %589 = vrot.lane.b32.xlu0 %v582, 127
    %v590 = vpop.permute.xlu0 %589
    %591 = vrot.lane.b32.xlu0 %v583, 127
    %v592 = vpop.permute.xlu0 %591
    %595 = vrot.lane.b32.xlu0 %v582, 126
    %v596 = vpop.permute.xlu0 %595
    %597 = vrot.lane.b32.xlu0 %v583, 126
    %v598 = vpop.permute.xlu0 %597
    %v601 = vld [vmem:[%s6] sm:$0xff]
    %v602 = vld [vmem:[%s6 + $0x8] sm:$0xff]
    %v603 = vld [vmem:[%s6 + $0x10] sm:$0xff]
    %605 = vset.pattern.permute.xlu0 0
    %606 = vperm.xlu0 %605, %v601
    %v607 = vpop.permute.xlu0 %606
    %610 = vset.pattern.permute.xlu0 0
    %611 = vperm.xlu0 %610, %v602
    %v612 = vpop.permute.xlu0 %611
    %615 = vset.pattern.permute.xlu0 0
    %616 = vperm.xlu0 %615, %v603
    %v617 = vpop.permute.xlu0 %616
    %v620 = vsel %vm287, %v584, 0
    %v623 = vsel %vm287, %v585, 0
    %v626 = vsel %vm287, %v586, 0
    %628 = vmatprep.subr.mxu0 0.0
    %629 = vmatpush1.msra.mxu0 %v582
    %630 = vmatprep.subr.mxu0 0.0
    %631 = vmatpush1.msra.mxu0 %v583
    %632 = vmatprep.subr.mxu0 0.0
    %633 = vmatpush1.msra.mxu0 %v590
    %634 = vmatprep.subr.mxu0 0.0
    %635 = vmatpush1.msra.mxu0 %v592
    %636 = vmatprep.subr.mxu0 0.0
    %637 = vmatpush1.msra.mxu0 %v596
    %638 = vmatprep.subr.mxu0 0.0
    %639 = vmatpush1.msra.mxu0 %v598
    %640 = vmatprep.subr.mxu0 0.0
    %641 = vmatpush1.msra.mxu0 0.0
    %642 = vmatprep.subr.mxu0 0.0
    %643 = vmatpush1.msra.mxu0 0.0
    %644 = vmatprep.subr.mxu0 0.0
    %645 = vmatpush1.msra.mxu0 0.0
    %646 = vmatprep.subr.mxu0 0.0
    %647 = vmatpush1.msra.mxu0 0.0
    %648 = vmatprep.subr.mxu0 0.0
    %649 = vmatpush1.msra.mxu0 0.0
    %650 = vmatprep.subr.mxu0 0.0
    %651 = vmatpush1.msra.mxu0 0.0
    %652 = vmatprep.subr.mxu0 0.0
    %653 = vmatpush1.msra.mxu0 0.0
    %654 = vmatprep.subr.mxu0 0.0
    %655 = vmatpush1.msra.mxu0 0.0
    %656 = vmatprep.subr.mxu0 0.0
    %657 = vmatpush1.msra.mxu0 0.0
    %658 = vmatprep.subr.mxu0 0.0
    %659 = vmatpush1.msra.mxu0 0.0
    %660 = vmatprep.subr.mxu0 0.0
    %661 = vmatpush1.msra.mxu0 0.0
    %662 = vmatprep.subr.mxu0 0.0
    %663 = vmatpush1.msra.mxu0 0.0
    %664 = vmatprep.subr.mxu0 0.0
    %665 = vmatpush1.msra.mxu0 0.0
    %666 = vmatprep.subr.mxu0 0.0
    %667 = vmatpush1.msra.mxu0 0.0
    %668 = vmatprep.subr.mxu0 0.0
    %669 = vmatpush1.msra.mxu0 0.0
    %670 = vmatprep.subr.mxu0 0.0
    %671 = vmatpush1.msra.mxu0 0.0
    %672 = vmatprep.subr.mxu0 0.0
    %673 = vmatpush1.msra.mxu0 0.0
    %674 = vmatprep.subr.mxu0 0.0
    %675 = vmatpush1.msra.mxu0 0.0
    %676 = vmatprep.subr.mxu0 0.0
    %677 = vmatpush1.msra.mxu0 0.0
    %678 = vmatprep.subr.mxu0 0.0
    %679 = vmatpush1.msra.mxu0 0.0
    %680 = vmatprep.subr.mxu0 0.0
    %681 = vmatpush1.msra.mxu0 0.0
    %682 = vmatprep.subr.mxu0 0.0
    %683 = vmatpush1.msra.mxu0 0.0
    %684 = vmatprep.subr.mxu0 0.0
    %685 = vmatpush1.msra.mxu0 0.0
    %686 = vmatprep.subr.mxu0 0.0
    %687 = vmatpush1.msra.mxu0 0.0
    %688 = vmatprep.subr.mxu0 0.0
    %689 = vmatpush1.msra.mxu0 0.0
    %690 = vmatprep.subr.mxu0 0.0
    %691 = vmatpush1.msra.mxu0 0.0
    %692 = vmatprep.mubr.f32.mxu0 0.0
    %693 = vmatmul.mubr.f32.gmra.mrb[0].mxu0 %v620
    %v694 = vpop.f32.mrb[0].mxu0
    %v695 = vadd.f32 %v607, %v694
    %v696 = vpop.f32.mrb[0].mxu0
    %697 = vmatprep.mubr.f32.mxu0 0.0
    %698 = vmatmul.mubr.f32.gmra.mrb[0].mxu0 %v623
    %v699 = vpop.f32.mrb[0].mxu0
    %v700 = vadd.f32 %v612, %v699
    %v701 = vpop.f32.mrb[0].mxu0
    %702 = vmatprep.mubr.f32.mxu0 0.0
    %703 = vmatmul.mubr.f32.gmra.mrb[0].mxu0 %v626
    %v704 = vpop.f32.mrb[0].mxu0
    %v705 = vadd.f32 %v617, %v704
    %v706 = vpop.f32.mrb[0].mxu0
    %707 = vdwg.mxu0
    %v708 = vmax.f32 %v695, 0.0
    %v709 = vmax.f32 %v700, 0.0
    %v710 = vmax.f32 %v705, 0.0
    %s711 = scalar_lea.vmem %s7, 24
    %712 = vst.msk [vmem:[%s711] sm:$0xff] %vm380, %v708
    %713 = vst.msk [vmem:[%s711 + $0x8] sm:$0xff] %vm380, %v709
    %714 = vst.msk [vmem:[%s711 + $0x10] sm:$0xff] %vm380, %v710
    // Predicated region
    $region34: #{tpu_custom_call.1} parent=1 // pred_check
      _
    $region35: #{tpu_custom_call.1} parent=1 // pred_check_branch
      %716 = sbr.rel (0) target = $region37
    $region36: #{tpu_custom_call.1} parent=1 // pred_region
      _
    $region37: #{tpu_custom_call.1} parent=1 // pred_fallthru
      _
    // Predicated region
    $region38: #{tpu_custom_call.1} parent=1 // pred_check
      _
    $region39: #{tpu_custom_call.1} parent=1 // pred_check_branch
      %718 = sbr.rel (0) target = $region41
    $region40: #{tpu_custom_call.1} parent=1 // pred_region
      _
    $region41: #{tpu_custom_call.1} parent=1 // pred_fallthru
      _
    %719 = vsyncpa [#allocation3], 1

</llo_original>
